<compile_context>
chip_gen: v6e
topology: v6e:2x2x1
jax: 0.10.0
libtpu: 0.0.40
codegen_flags: <defaults>
</compile_context>

<pallas_src>
import jax
import jax.numpy as jnp
from jax.experimental import pallas as pl
from jax.experimental.pallas import tpu as pltpu


def mlp_kernel(x_ref, w1_ref, b1_ref, w2_ref, b2_ref, o_ref):
    # x_ref : (1, B)  batch on lanes
    # w1_ref: (H, 1)  hidden on sublanes
    # b1_ref: (H, 1)
    # w2_ref: (H, 1)
    # b2_ref: (1, 1)  SMEM scalar
    # o_ref : (1, B)  lane-dense output

    # Layer 1 (K=1 contraction) as a VPU outer product: (H,1)*(1,B) -> (H,B)
    h = w1_ref[...] * x_ref[...] + b1_ref[...]
    h = jnp.maximum(h, 0.0)                      # ReLU on the VPU

    # Layer 2 (N=1 matmul) as VPU multiply + XLU sublane reduction:
    # out[0, b] = sum_h w2[h] * h[h, b] + b2
    out = jnp.sum(w2_ref[...] * h, axis=0, keepdims=True) + b2_ref[0, 0]

    o_ref[...] = out                             # single unmasked store


def net_forward(x, w1, b1, w2, b2):
    """Pallas forward pass for Net (specialised to n_feature=1, n_output=1).

    x : (B, 1) f32
    w1: (1, H) f32 (stored (in, out) = torch W1.T), b1: (1, H) f32
    w2: (H, 1) f32 (stored (in, out) = torch W2.T), b2: (1, 1) f32
    returns (B, 1) f32
    """
    B, n_feature = x.shape
    H = w1.shape[1]
    n_output = w2.shape[1]
    # The VPU outer-product / lane-reduce formulation requires the degenerate
    # contraction sizes this module is used with in the original script.
    assert n_feature == 1 and n_output == 1, "kernel specialised to 1 -> H -> 1"

    # Layout plumbing in the wrapper (all reshapes involve a unit dim -> free):
    x_t = x.reshape(1, B)        # batch on the lane axis
    w1_col = w1.reshape(H, 1)    # hidden on the sublane axis
    b1_col = b1.reshape(H, 1)
    w2_col = w2.reshape(H, 1)
    b2_s = b2.reshape(1, 1)      # true scalar -> SMEM

    full = lambda shape: pl.BlockSpec(shape, lambda: (0,) * len(shape))

    out_t = pl.pallas_call(
        mlp_kernel,
        out_shape=jax.ShapeDtypeStruct((1, B), jnp.float32),
        grid=(),
        in_specs=[
            full((1, B)),                                        # x (VMEM)
            full((H, 1)),                                        # w1 (VMEM)
            full((H, 1)),                                        # b1 (VMEM)
            full((H, 1)),                                        # w2 (VMEM)
            pl.BlockSpec(memory_space=pltpu.MemorySpace.SMEM),   # b2 (SMEM scalar)
        ],
        out_specs=full((1, B)),
    )(x_t, w1_col, b1_col, w2_col, b2_s)

    return out_t.reshape(B, n_output)


def init_params(key, n_feature, n_hidden, n_output):
    """Deterministic synthetic parameter init (matches nn.Linear shapes)."""
    k1, k2, k3, k4 = jax.random.split(key, 4)
    # Stored transposed relative to torch: (in, out).
    w1 = jax.random.normal(k1, (n_feature, n_hidden), jnp.float32) * 0.1
    b1 = jax.random.normal(k2, (1, n_hidden), jnp.float32) * 0.1
    w2 = jax.random.normal(k3, (n_hidden, n_output), jnp.float32) * 0.1
    b2 = jax.random.normal(k4, (1, n_output), jnp.float32) * 0.1
    return w1, b1, w2, b2


if __name__ == "__main__":
    # Original script: mtcars 'mpg' as the single feature column -> (rows, 1).
    # Use batch=32 (mtcars row count), hidden=32, single regression output.
    n_feature, n_hidden, n_output = 1, 32, 1
    batch = 32

    key = jax.random.PRNGKey(0)
    kx, kp = jax.random.split(key)
    x = jax.random.normal(kx, (batch, n_feature), jnp.float32) * 5.0 + 20.0
    w1, b1, w2, b2 = init_params(kp, n_feature, n_hidden, n_output)

    out = net_forward(x, w1, b1, w2, b2)
    out = jax.block_until_ready(out)

    # Cross-check against a plain-JAX reference of the same forward pass.
    ref = jnp.maximum(x @ w1 + b1, 0.0) @ w2 + b2
    assert out.shape == (batch, n_output)
    assert jnp.allclose(out, ref, atol=1e-5, rtol=1e-5)

    print("KERNEL_OK")
</pallas_src>

<mosaic_0001>
module attributes {stable_mosaic.version = 11 : i64} {
  func.func @mlp_kernel(%arg0: memref<1x32xf32, #tpu.memory_space<vmem>>, %arg1: memref<32x1xf32, #tpu.memory_space<vmem>>, %arg2: memref<32x1xf32, #tpu.memory_space<vmem>>, %arg3: memref<32x1xf32, #tpu.memory_space<vmem>>, %arg4: memref<1x1xf32, #tpu.memory_space<smem>>, %arg5: memref<1x32xf32, #tpu.memory_space<vmem>>) attributes {dimension_semantics = [], scalar_prefetch = 0 : i64, scratch_operands = 0 : i64, tpu.core_type = #tpu.core_type<tc>} {
    %c0 = arith.constant 0 : index
    %c0_0 = arith.constant 0 : index
    %0 = vector.load %arg1[%c0, %c0_0] : memref<32x1xf32, #tpu.memory_space<vmem>>, vector<32x1xf32>
    %c0_1 = arith.constant 0 : index
    %c0_2 = arith.constant 0 : index
    %1 = vector.load %arg0[%c0_1, %c0_2] : memref<1x32xf32, #tpu.memory_space<vmem>>, vector<1x32xf32>
    %2 = vector.broadcast %0 : vector<32x1xf32> to vector<32x32xf32>
    %3 = vector.broadcast %1 : vector<1x32xf32> to vector<32x32xf32>
    %4 = arith.mulf %2, %3 : vector<32x32xf32>
    %c0_3 = arith.constant 0 : index
    %c0_4 = arith.constant 0 : index
    %5 = vector.load %arg2[%c0_3, %c0_4] : memref<32x1xf32, #tpu.memory_space<vmem>>, vector<32x1xf32>
    %6 = vector.broadcast %5 : vector<32x1xf32> to vector<32x32xf32>
    %7 = arith.addf %4, %6 : vector<32x32xf32>
    %cst = arith.constant 0.000000e+00 : f32
    %8 = vector.broadcast %cst : f32 to vector<32x32xf32>
    %9 = arith.maximumf %7, %8 : vector<32x32xf32>
    %c0_5 = arith.constant 0 : index
    %c0_6 = arith.constant 0 : index
    %10 = vector.load %arg3[%c0_5, %c0_6] : memref<32x1xf32, #tpu.memory_space<vmem>>, vector<32x1xf32>
    %11 = vector.broadcast %10 : vector<32x1xf32> to vector<32x32xf32>
    %12 = arith.mulf %11, %9 : vector<32x32xf32>
    %cst_7 = arith.constant dense<0.000000e+00> : vector<32xf32>
    %13 = vector.multi_reduction <add>, %12, %cst_7 [0] : vector<32x32xf32> to vector<32xf32>
    %14 = vector.shape_cast %13 : vector<32xf32> to vector<1x32xf32>
    %c0_8 = arith.constant 0 : index
    %c0_9 = arith.constant 0 : index
    %15 = memref.load %arg4[%c0_8, %c0_9] : memref<1x1xf32, #tpu.memory_space<smem>>
    %16 = vector.broadcast %15 : f32 to vector<1x32xf32>
    %17 = arith.addf %14, %16 : vector<1x32xf32>
    %c0_10 = arith.constant 0 : index
    %c0_11 = arith.constant 0 : index
    %18 = vector.load %arg5[%c0_10, %c0_11] : memref<1x32xf32, #tpu.memory_space<vmem>>, vector<1x32xf32>
    tpu.vector_store %arg5[%c0_10, %c0_11], %17 {strides = array<i32>} : memref<1x32xf32, #tpu.memory_space<vmem>>, vector<1x32xf32>,
    return
  }
}

</mosaic_0001>

<llo_original>
// kernel: tpu_custom_call.1
$region0: #{tpu_custom_call.1}
  #allocation0 [shape = 'u32[]', space=smem, size = 0x4, offset = 0x4, fixed_abs, tag = 'smem constant byte address 0x4 - core index']
  #allocation1 [shape = 'u32[144,128]{1,0:T(1,128)}', space=vmem, size = 0x12000, scoped, tag = 'internal scratch']
  #allocation2 [shape = 'f32[1,1]{1,0:T(1,128)S(6)}', space=smem, size = 0x200, scoped, tag = 'scoped memory for tpu_custom_call.1']
  %s0 = inlined_call_operand.vmem [shape: f32[1,32], index: 0, kind: input, shape index: {}]
  %s1 = inlined_call_operand.vmem [shape: f32[32,1], index: 1, kind: input, shape index: {}]
  %s2 = inlined_call_operand.vmem [shape: f32[32,1], index: 2, kind: input, shape index: {}]
  %s3 = inlined_call_operand.vmem [shape: f32[32,1], index: 3, kind: input, shape index: {}]
  %s4 = inlined_call_operand.<no memory space> [shape: f32[1,1], index: 4, kind: input, shape index: {}]
  %s5 = inlined_call_operand.hbm [shape: f32[1,32], index: 5, kind: output, shape index: {}]
  %s6 = sld [smem:[#allocation0]]
  $region30: #{tpu_custom_call.1} parent=0
    _
  %s8 = ssub.s32 1, %s6
  %s9 = scalar_select 0, %s8, %s6
  %10 = sst [smem:[#allocation2]] %s4
  $region1: #{tpu_custom_call.1} parent=0
    #allocation3 [shape = 'u8[512]{0}', space=vmem, size = 0x400, scoped, tag = 'output window, operand 0, single buffered']
    #allocation4 [shape = 's32[1]{0}', space=sflag, size = 0x4, scoped, tag = 'scoped memory for tpu_custom_call.1']
    %11 = vsyncpa [#allocation4], 0
    // Predicated region
    $region2: #{tpu_custom_call.1} parent=1 // pred_check
      _
    $region3: #{tpu_custom_call.1} parent=1 // pred_check_branch
      %13 = sbr.rel (0) target = $region5
    $region4: #{tpu_custom_call.1} parent=1 // pred_region
      _
    $region5: #{tpu_custom_call.1} parent=1 // pred_fallthru
      _
    // Predicated region
    $region6: #{tpu_custom_call.1} parent=1 // pred_check
      _
    $region7: #{tpu_custom_call.1} parent=1 // pred_check_branch
      %15 = sbr.rel (0) target = $region9
    $region8: #{tpu_custom_call.1} parent=1 // pred_region
      _
    $region9: #{tpu_custom_call.1} parent=1 // pred_fallthru
      _
    // Predicated region
    $region10: #{tpu_custom_call.1} parent=1 // pred_check
      _
    $region11: #{tpu_custom_call.1} parent=1 // pred_check_branch
      %17 = sbr.rel (0) target = $region13
    $region12: #{tpu_custom_call.1} parent=1 // pred_region
      _
    $region13: #{tpu_custom_call.1} parent=1 // pred_fallthru
      _
    // Predicated region
    $region14: #{tpu_custom_call.1} parent=1 // pred_check
      _
    $region15: #{tpu_custom_call.1} parent=1 // pred_check_branch
      %19 = sbr.rel (0) target = $region17
    $region16: #{tpu_custom_call.1} parent=1 // pred_region
      _
    $region17: #{tpu_custom_call.1} parent=1 // pred_fallthru
      _
    // Predicated region
    $region18: #{tpu_custom_call.1} parent=1 // pred_check
      _
    $region19: #{tpu_custom_call.1} parent=1 // pred_check_branch
      %21 = sbr.rel (0) target = $region21
    $region20: #{tpu_custom_call.1} parent=1 // pred_region
      _
    $region21: #{tpu_custom_call.1} parent=1 // pred_fallthru
      _
    %v22 = vld [vmem:[%s1] sm:$0xff]
    %v23 = vld [vmem:[%s1 + $0x8] sm:$0xff]
    %v24 = vld [vmem:[%s1 + $0x10] sm:$0xff]
    %v25 = vld [vmem:[%s1 + $0x18] sm:$0xff]
    %v26 = vld [vmem:[%s0] sm:$0x1]
    %28 = vset.pattern.permute.xlu0 0
    %29 = vperm.xlu0 %28, %v22
    %v30 = vpop.permute.xlu0 %29
    %33 = vset.pattern.permute.xlu0 0
    %34 = vperm.xlu0 %33, %v23
    %v35 = vpop.permute.xlu0 %34
    %38 = vset.pattern.permute.xlu0 0
    %39 = vperm.xlu0 %38, %v24
    %v40 = vpop.permute.xlu0 %39
    %43 = vset.pattern.permute.xlu0 0
    %44 = vperm.xlu0 %43, %v25
    %v45 = vpop.permute.xlu0 %44
    %v48 = vlaneseq
    %v49 = vshrl.u32 %v48, 7
    %v50 = vsub.s32 0, %v49
    %v51 = vrot.slane %v26, %v50
    %v53 = vmul.f32 %v30, %v51
    %v54 = vmul.f32 %v35, %v51
    %v55 = vmul.f32 %v40, %v51
    %v56 = vmul.f32 %v45, %v51
    %v57 = vld [vmem:[%s2] sm:$0xff]
    %v58 = vld [vmem:[%s2 + $0x8] sm:$0xff]
    %v59 = vld [vmem:[%s2 + $0x10] sm:$0xff]
    %v60 = vld [vmem:[%s2 + $0x18] sm:$0xff]
    %62 = vset.pattern.permute.xlu0 0
    %63 = vperm.xlu0 %62, %v57
    %v64 = vpop.permute.xlu0 %63
    %67 = vset.pattern.permute.xlu0 0
    %68 = vperm.xlu0 %67, %v58
    %v69 = vpop.permute.xlu0 %68
    %72 = vset.pattern.permute.xlu0 0
    %73 = vperm.xlu0 %72, %v59
    %v74 = vpop.permute.xlu0 %73
    %77 = vset.pattern.permute.xlu0 0
    %78 = vperm.xlu0 %77, %v60
    %v79 = vpop.permute.xlu0 %78
    %v81 = vadd.f32 %v53, %v64
    %v82 = vadd.f32 %v54, %v69
    %v83 = vadd.f32 %v55, %v74
    %v84 = vadd.f32 %v56, %v79
    %v85 = vmax.f32 %v81, 0.0
    %v86 = vmax.f32 %v82, 0.0
    %v87 = vmax.f32 %v83, 0.0
    %v88 = vmax.f32 %v84, 0.0
    %v89 = vld [vmem:[%s3] sm:$0xff]
    %v90 = vld [vmem:[%s3 + $0x8] sm:$0xff]
    %v91 = vld [vmem:[%s3 + $0x10] sm:$0xff]
    %v92 = vld [vmem:[%s3 + $0x18] sm:$0xff]
    %94 = vset.pattern.permute.xlu0 0
    %95 = vperm.xlu0 %94, %v89
    %v96 = vpop.permute.xlu0 %95
    %99 = vset.pattern.permute.xlu0 0
    %100 = vperm.xlu0 %99, %v90
    %v101 = vpop.permute.xlu0 %100
    %104 = vset.pattern.permute.xlu0 0
    %105 = vperm.xlu0 %104, %v91
    %v106 = vpop.permute.xlu0 %105
    %109 = vset.pattern.permute.xlu0 0
    %110 = vperm.xlu0 %109, %v92
    %v111 = vpop.permute.xlu0 %110
    %v113 = vmul.f32 %v96, %v85
    %v114 = vmul.f32 %v101, %v86
    %v115 = vmul.f32 %v106, %v87
    %v116 = vmul.f32 %v111, %v88
    %vm117 = vcmask 261120
    %v118 = vsel %vm117, %v113, 0.0
    %v119 = vsel %vm117, %v114, 0.0
    %v120 = vadd.f32 %v118, %v119
    %v121 = vsel %vm117, %v115, 0.0
    %v122 = vadd.f32 %v120, %v121
    %v123 = vsel %vm117, %v116, 0.0
    %v124 = vadd.f32 %v122, %v123
    %v125 = vrot.slane %v124, 4
    %v126 = vadd.f32 %v124, %v125
    %v127 = vrot.slane %v126, 2
    %v128 = vadd.f32 %v126, %v127
    %v129 = vrot.slane %v128, 1
    %v130 = vadd.f32 %v128, %v129
    %s131 = sld [smem:[#allocation2]]
    %v132 = vstv %s131
    %v133 = vadd.f32 %v130, %v132
    %vm134 = vcmask 253952
    %135 = vst.msk [vmem:[#allocation3] sm:$0x1] %vm134, %v133
    // Predicated region
    $region22: #{tpu_custom_call.1} parent=1 // pred_check
      _
    $region23: #{tpu_custom_call.1} parent=1 // pred_check_branch
      %137 = sbr.rel (0) target = $region25
    $region24: #{tpu_custom_call.1} parent=1 // pred_region
      %s139 = ssub.s32 16, 16
      %140 = vsyncadd [#allocation4], %s139
      %s142 = sshll.u32 [#allocation3], 4
      %s143 = int_to_ptr.vmem [resolvable:$true] %s142
      %145 = dma.vmem_to_hbm [thread:$0]  %s143, 16, %s5, [#allocation4]
    $region25: #{tpu_custom_call.1} parent=1 // pred_fallthru
      _
    // Predicated region
    $region26: #{tpu_custom_call.1} parent=1 // pred_check
      _
    $region27: #{tpu_custom_call.1} parent=1 // pred_check_branch
      %147 = sbr.rel (0) target = $region29
    $region28: #{tpu_custom_call.1} parent=1 // pred_region
      %148 = dma.done [#allocation4], 16
    $region29: #{tpu_custom_call.1} parent=1 // pred_fallthru
      _
    %149 = vsyncpa [#allocation4], 1

</llo_original>
